<compile_context>
chip_gen: v5e
topology: v5e:2x2
jax: 0.10.0
libtpu: 0.0.40
codegen_flags: <defaults>
</compile_context>

<pallas_src>
import functools
import math

import jax
import jax.numpy as jnp
from jax import lax
from jax.experimental import pallas as pl
from jax.experimental.pallas import tpu as pltpu


def _round_up(x: int, m: int) -> int:
    return ((x + m - 1) // m) * m


def _cdiv(a: int, b: int) -> int:
    return (a + b - 1) // b


def _vmem_capacity_bytes() -> int:
    """Physical VMEM of the local chip; conservative (v7x) fallback."""
    try:
        return int(pltpu.get_tpu_info().vmem_capacity_bytes)
    except Exception:
        return 64 * 1024 * 1024


def _topk_kernel(x_ref, o_ref, *, k: int, use_packed_key: bool):
    """Per-row ReLU + top-k mask on a (ROW_BLOCK, D) tile."""
    R, D = x_ref.shape
    col = lax.broadcasted_iota(jnp.int32, (R, D), 1)
    # Bounded unroll: captures XLU-latency overlap between neighboring
    # iterations without blowing up the instruction stream / vreg pressure.
    unroll = min(k, 4)

    if use_packed_key:
        # bf16 path (D <= 65536): pack value+index into one int32 key.
        # bf16 -> f32 conversion is exact and leaves the low 16 bits zero, so
        # the index field never perturbs the value ordering.  Post-ReLU values
        # are >= 0, so the f32 bit pattern is order-preserving as int32
        # (-0.0 is clamped to 0).  (0xFFFF - col) breaks ties toward the
        # lowest index, matching lax.top_k / torch.topk.
        xr32 = jnp.maximum(x_ref[...].astype(jnp.float32), 0.0)
        vbits = jnp.maximum(pltpu.bitcast(xr32, jnp.int32), 0)
        key0 = vbits | (0xFFFF - col)

        def body(_, key):
            m = jnp.max(key, axis=-1, keepdims=True)       # 1 XLU reduce/iter
            return jnp.where(key == m, -1, key)            # knock out exactly 1/row

        key = lax.fori_loop(0, k, body, key0, unroll=unroll)
        sel = key < 0                                       # knocked-out == selected
    else:
        # Generic path (f32 input, or fallback): explicit argmax with
        # lowest-index tie-break.  Compute in f32 (exact upcast; avoids
        # repeated sub-32-bit pack/unpack on v5e).
        neg_inf = jnp.float32(-jnp.inf)
        w0 = jnp.maximum(x_ref[...].astype(jnp.float32), 0.0)

        def body(_, w):
            m = jnp.max(w, axis=-1, keepdims=True)
            first = jnp.min(jnp.where(w == m, col, D), axis=-1, keepdims=True)
            return jnp.where(col == first, neg_inf, w)

        w = lax.fori_loop(0, k, body, w0, unroll=unroll)
        sel = w < 0

    # Recompute the ReLU from the (already VMEM-resident) input tile instead
    # of carrying it across the loop: one vld + one VPU max, free under the
    # XLU-bound loop, and it frees a full-tile live range.
    o_ref[...] = jnp.where(sel, jnp.maximum(x_ref[...], 0), 0).astype(o_ref.dtype)
    # TODO(synk): for large k (>~16) replace the O(k) extract-max loop with a
    # k-independent threshold binary search (~16 lane-sum reductions total).


def topk_relu(
    x: jax.Array,
    k: int,
    *,
    target_tile_bytes: int | None = None,
    max_row_block: int = 4096,
) -> jax.Array:
    """ReLU then keep only the top-k entries of the last axis (others -> 0)."""
    orig_shape = x.shape
    D = int(orig_shape[-1])
    if not (0 < k <= D):
        raise ValueError(f"k={k} must satisfy 0 < k <= D={D}")

    dt = jnp.dtype(x.dtype)
    if dt not in (jnp.dtype(jnp.float32), jnp.dtype(jnp.bfloat16), jnp.dtype(jnp.float16)):
        raise ValueError(f"unsupported dtype {dt}; expected float32/bfloat16/float16")

    rows = math.prod(orig_shape[:-1]) if len(orig_shape) > 1 else 1
    x2 = x.reshape(rows, D)

    itemsize = dt.itemsize
    # Sub-32-bit dtypes pack along sublanes: keep packed vregs full.
    granule = 8 if itemsize >= 4 else 16

    vmem_cap = _vmem_capacity_bytes()
    small_vmem = vmem_cap <= 64 * 1024 * 1024          # v7x
    if target_tile_bytes is None:
        # v5e/v6e (128 MiB VMEM) amortize per-step overhead with bigger tiles;
        # v7x (64 MiB) stays smaller to avoid VMEM OOM / spills.
        target_tile_bytes = (2 if small_vmem else 4) * 1024 * 1024

    rb = max(granule, min(target_tile_bytes // max(D * itemsize, 1), max_row_block))
    rb = max(granule, (rb // granule) * granule)
    rb = min(rb, _round_up(rows, granule))

    # Aim for >= 4 grid steps (>= 2 per TensorCore on v7x megacore) when rows
    # permit, without shrinking tiles to where per-step overhead dominates.
    min_split_rb = max(granule, 256)
    while _cdiv(rows, rb) < 4 and rb > min_split_rb:
        rb = max(min_split_rb, ((rb // 2) // granule) * granule)

    num_steps = _cdiv(rows, rb)

    # VMEM budget: in/out double-buffers (4 io tiles) + int32 key/iota/select
    # temporaries.  Cap at 32 MiB on v7x (64 MiB physical), 64 MiB on v5e/v6e.
    io_tile = rb * D * itemsize
    tmp_tile = rb * D * 4
    vmem_cap_limit = (32 if small_vmem else 64) * 1024 * 1024
    vmem_limit = int(min(vmem_cap_limit,
                         max(16 * 1024 * 1024, 4 * io_tile + 8 * tmp_tile)))

    # Packed value+index key needs the 16-bit index field -> bf16 only, D<=64K.
    use_packed = (dt == jnp.dtype(jnp.bfloat16)) and (D <= 0x10000)

    in_spec = pl.BlockSpec((rb, D), lambda i: (i, 0))
    if k <= 4 and num_steps >= 8:
        # Memory-bound small-k regime: a 3rd input buffer hides the next
        # tile's DMA behind the short compute.
        try:
            in_spec = pl.BlockSpec((rb, D), lambda i: (i, 0),
                                   pipeline_mode=pl.Buffered(3))
        except TypeError:
            pass  # older Pallas without pipeline_mode; default double-buffer

    out = pl.pallas_call(
        functools.partial(_topk_kernel, k=k, use_packed_key=use_packed),
        out_shape=jax.ShapeDtypeStruct((rows, D), x.dtype),
        grid=(num_steps,),                       # partial last block; no host pad
        in_specs=[in_spec],
        out_specs=pl.BlockSpec((rb, D), lambda i: (i, 0)),
        compiler_params=pltpu.CompilerParams(
            dimension_semantics=("parallel",),
            vmem_limit_bytes=vmem_limit,
        ),
    )(x2)

    return out.reshape(orig_shape)
    # TODO(synk): for D < 128 (demo D=32) lanes are only partially used; a
    # rows-on-lanes segmented layout would be lane-dense but needs segmented
    # reductions.  Real SAE feature dims (multiples of 128) are already
    # lane-dense with this layout.


def _reference(x: jax.Array, k: int) -> jax.Array:
    # Pure-JAX reference mirroring the PyTorch module.
    xr = jnp.maximum(x, 0.0)
    vals, idxs = lax.top_k(xr, k)
    zeros = jnp.zeros_like(xr)
    return jnp.put_along_axis(zeros, idxs, vals, axis=-1, inplace=False)


if __name__ == "__main__":
    key = jax.random.PRNGKey(0)
    B, S, H = 2, 8, 32          # small demo shapes; top-k over H
    k = 4
    x = jax.random.normal(key, (B, S, H), dtype=jnp.float32)

    y = topk_relu(x, k)
    jax.block_until_ready(y)
    y_ref = _reference(x, k)
    assert jnp.allclose(y, y_ref, atol=1e-6), "mismatch vs reference (f32)"
    assert int(jnp.max(jnp.sum(y > 0, axis=-1))) <= k

    # Row count not divisible by the row block + forced small row block ->
    # exercises the partial last block (no host-side pad/slice anymore).
    x2 = jax.random.normal(jax.random.PRNGKey(1), (3, 5, 32), dtype=jnp.float32)
    y2 = topk_relu(x2, 3, target_tile_bytes=1)   # forces rb=8, grid=(2,), partial tail
    jax.block_until_ready(y2)
    y2_ref = _reference(x2, 3)
    assert jnp.allclose(y2, y2_ref, atol=1e-6), "mismatch vs reference (partial block)"
    assert int(jnp.max(jnp.sum(y2 > 0, axis=-1))) <= 3

    # bf16 input -> packed value+index key path (single reduction / iteration).
    x3 = jax.random.normal(jax.random.PRNGKey(2), (4, 8, 32), dtype=jnp.bfloat16)
    y3 = topk_relu(x3, 4)
    jax.block_until_ready(y3)
    y3_ref = _reference(x3, 4)
    assert jnp.allclose(y3.astype(jnp.float32), y3_ref.astype(jnp.float32),
                        atol=1e-6), "mismatch vs reference (bf16 packed-key)"
    assert int(jnp.max(jnp.sum(y3.astype(jnp.float32) > 0, axis=-1))) <= 4

    print("KERNEL_OK")
</pallas_src>

<mosaic_0001>
module attributes {stable_mosaic.version = 11 : i64} {
  func.func @_topk_kernel(%arg0: i32, %arg1: memref<16x32xf32, #tpu.memory_space<vmem>>, %arg2: memref<16x32xf32, #tpu.memory_space<vmem>>) attributes {dimension_semantics = [#tpu.dimension_semantics<parallel>], iteration_bounds = array<i64: 1>, scalar_prefetch = 0 : i64, scratch_operands = 0 : i64, tpu.core_type = #tpu.core_type<tc>, window_params = [{transform_indices = @transform_0, window_bounds = array<i64: 16, 32>}, {transform_indices = @transform_1, window_bounds = array<i64: 16, 32>}]} {
    %0 = tpu.iota {dimensions = array<i32: 1>} : vector<16x32xi32>
    %c0 = arith.constant 0 : index
    %c0_0 = arith.constant 0 : index
    %1 = vector.load %arg1[%c0, %c0_0] : memref<16x32xf32, #tpu.memory_space<vmem>>, vector<16x32xf32>
    %cst = arith.constant 0.000000e+00 : f32
    %2 = vector.broadcast %cst : f32 to vector<16x32xf32>
    %3 = arith.maximumf %1, %2 : vector<16x32xf32>
    %cst_1 = arith.constant 0xFF800000 : f32
    %c0_i32 = arith.constant 0 : i32
    %cst_2 = arith.constant dense<0xFF800000> : vector<16xf32>
    %4 = vector.multi_reduction <maximumf>, %3, %cst_2 [1] : vector<16x32xf32> to vector<16xf32>
    %5 = vector.shape_cast %4 : vector<16xf32> to vector<16x1xf32>
    %6 = vector.broadcast %5 : vector<16x1xf32> to vector<16x32xf32>
    %7 = arith.cmpf oeq, %3, %6 : vector<16x32xf32>
    %c32_i32 = arith.constant 32 : i32
    %8 = vector.broadcast %c32_i32 : i32 to vector<16x32xi32>
    %9 = arith.select %7, %0, %8 : vector<16x32xi1>, vector<16x32xi32>
    %cst_3 = arith.constant dense<2147483647> : vector<16xi32>
    %10 = vector.multi_reduction <minsi>, %9, %cst_3 [1] : vector<16x32xi32> to vector<16xi32>
    %11 = vector.shape_cast %10 : vector<16xi32> to vector<16x1xi32>
    %12 = vector.broadcast %11 : vector<16x1xi32> to vector<16x32xi32>
    %13 = arith.cmpi eq, %0, %12 : vector<16x32xi32>
    %14 = vector.broadcast %cst_1 : f32 to vector<16x32xf32>
    %15 = arith.select %13, %14, %3 : vector<16x32xi1>, vector<16x32xf32>
    %c1_i32 = arith.constant 1 : i32
    %cst_4 = arith.constant dense<0xFF800000> : vector<16xf32>
    %16 = vector.multi_reduction <maximumf>, %15, %cst_4 [1] : vector<16x32xf32> to vector<16xf32>
    %17 = vector.shape_cast %16 : vector<16xf32> to vector<16x1xf32>
    %18 = vector.broadcast %17 : vector<16x1xf32> to vector<16x32xf32>
    %19 = arith.cmpf oeq, %15, %18 : vector<16x32xf32>
    %c32_i32_5 = arith.constant 32 : i32
    %20 = vector.broadcast %c32_i32_5 : i32 to vector<16x32xi32>
    %21 = arith.select %19, %0, %20 : vector<16x32xi1>, vector<16x32xi32>
    %cst_6 = arith.constant dense<2147483647> : vector<16xi32>
    %22 = vector.multi_reduction <minsi>, %21, %cst_6 [1] : vector<16x32xi32> to vector<16xi32>
    %23 = vector.shape_cast %22 : vector<16xi32> to vector<16x1xi32>
    %24 = vector.broadcast %23 : vector<16x1xi32> to vector<16x32xi32>
    %25 = arith.cmpi eq, %0, %24 : vector<16x32xi32>
    %26 = vector.broadcast %cst_1 : f32 to vector<16x32xf32>
    %27 = arith.select %25, %26, %15 : vector<16x32xi1>, vector<16x32xf32>
    %c2_i32 = arith.constant 2 : i32
    %cst_7 = arith.constant dense<0xFF800000> : vector<16xf32>
    %28 = vector.multi_reduction <maximumf>, %27, %cst_7 [1] : vector<16x32xf32> to vector<16xf32>
    %29 = vector.shape_cast %28 : vector<16xf32> to vector<16x1xf32>
    %30 = vector.broadcast %29 : vector<16x1xf32> to vector<16x32xf32>
    %31 = arith.cmpf oeq, %27, %30 : vector<16x32xf32>
    %c32_i32_8 = arith.constant 32 : i32
    %32 = vector.broadcast %c32_i32_8 : i32 to vector<16x32xi32>
    %33 = arith.select %31, %0, %32 : vector<16x32xi1>, vector<16x32xi32>
    %cst_9 = arith.constant dense<2147483647> : vector<16xi32>
    %34 = vector.multi_reduction <minsi>, %33, %cst_9 [1] : vector<16x32xi32> to vector<16xi32>
    %35 = vector.shape_cast %34 : vector<16xi32> to vector<16x1xi32>
    %36 = vector.broadcast %35 : vector<16x1xi32> to vector<16x32xi32>
    %37 = arith.cmpi eq, %0, %36 : vector<16x32xi32>
    %38 = vector.broadcast %cst_1 : f32 to vector<16x32xf32>
    %39 = arith.select %37, %38, %27 : vector<16x32xi1>, vector<16x32xf32>
    %c3_i32 = arith.constant 3 : i32
    %cst_10 = arith.constant dense<0xFF800000> : vector<16xf32>
    %40 = vector.multi_reduction <maximumf>, %39, %cst_10 [1] : vector<16x32xf32> to vector<16xf32>
    %41 = vector.shape_cast %40 : vector<16xf32> to vector<16x1xf32>
    %42 = vector.broadcast %41 : vector<16x1xf32> to vector<16x32xf32>
    %43 = arith.cmpf oeq, %39, %42 : vector<16x32xf32>
    %c32_i32_11 = arith.constant 32 : i32
    %44 = vector.broadcast %c32_i32_11 : i32 to vector<16x32xi32>
    %45 = arith.select %43, %0, %44 : vector<16x32xi1>, vector<16x32xi32>
    %cst_12 = arith.constant dense<2147483647> : vector<16xi32>
    %46 = vector.multi_reduction <minsi>, %45, %cst_12 [1] : vector<16x32xi32> to vector<16xi32>
    %47 = vector.shape_cast %46 : vector<16xi32> to vector<16x1xi32>
    %48 = vector.broadcast %47 : vector<16x1xi32> to vector<16x32xi32>
    %49 = arith.cmpi eq, %0, %48 : vector<16x32xi32>
    %50 = vector.broadcast %cst_1 : f32 to vector<16x32xf32>
    %51 = arith.select %49, %50, %39 : vector<16x32xi1>, vector<16x32xf32>
    %cst_13 = arith.constant 0.000000e+00 : f32
    %52 = vector.broadcast %cst_13 : f32 to vector<16x32xf32>
    %53 = arith.cmpf olt, %51, %52 : vector<16x32xf32>
    %c0_14 = arith.constant 0 : index
    %c0_15 = arith.constant 0 : index
    %54 = vector.load %arg1[%c0_14, %c0_15] : memref<16x32xf32, #tpu.memory_space<vmem>>, vector<16x32xf32>
    %cst_16 = arith.constant 0.000000e+00 : f32
    %55 = vector.broadcast %cst_16 : f32 to vector<16x32xf32>
    %56 = arith.maximumf %54, %55 : vector<16x32xf32>
    %c0_i32_17 = arith.constant 0 : i32
    %57 = arith.sitofp %c0_i32_17 : i32 to f32
    %58 = vector.broadcast %57 : f32 to vector<16x32xf32>
    %59 = arith.select %53, %56, %58 : vector<16x32xi1>, vector<16x32xf32>
    %c0_18 = arith.constant 0 : index
    %c0_19 = arith.constant 0 : index
    %60 = vector.load %arg2[%c0_18, %c0_19] : memref<16x32xf32, #tpu.memory_space<vmem>>, vector<16x32xf32>
    tpu.vector_store %arg2[%c0_18, %c0_19], %59 {strides = array<i32>} : memref<16x32xf32, #tpu.memory_space<vmem>>, vector<16x32xf32>,
    return
  }
  func.func @transform_0(%arg0: i32) -> (i32, i32) {
    %c0_i32 = arith.constant 0 : i32
    %c0_i32_0 = arith.constant 0 : i32
    return %arg0, %c0_i32 : i32, i32
  }
  func.func @transform_1(%arg0: i32) -> (i32, i32) {
    %c0_i32 = arith.constant 0 : i32
    %c0_i32_0 = arith.constant 0 : i32
    return %arg0, %c0_i32 : i32, i32
  }
}

</mosaic_0001>

<llo_original>
// kernel: tpu_custom_call.1
$region0: #{tpu_custom_call.1}
  #allocation0 [shape = 'u32[]', space=smem, size = 0x4, offset = 0x4, fixed_abs, tag = 'smem constant byte address 0x4 - core index']
  #allocation1 [shape = 'u32[72,128]{1,0:T(1,128)}', space=vmem, size = 0x9000, scoped, tag = 'internal scratch']
  %s0 = inlined_call_operand.hbm [shape: f32[16,32], index: 0, kind: input, shape index: {}]
  %s1 = inlined_call_operand.hbm [shape: f32[16,32], index: 1, kind: output, shape index: {}]
  %s2 = sld [smem:[#allocation0]]
  $region18: #{tpu_custom_call.1} parent=0
    _
  %s4 = ssub.s32 1, %s2
  %s5 = scalar_select 0, %s4, %s2
  $region1: #{tpu_custom_call.1} parent=0
    #allocation2 [shape = 'u8[8192]{0}', space=vmem, size = 0x2000, scoped, tag = 'input window, operand 0, single buffered']
    #allocation3 [shape = 's32[1]{0}', space=sflag, size = 0x4, scoped, tag = 'scoped memory for tpu_custom_call.1']
    #allocation4 [shape = 's32[1]{0}', space=sflag, size = 0x4, scoped, tag = 'scoped memory for tpu_custom_call.1']
    #allocation5 [shape = 'u8[8192]{0}', space=vmem, size = 0x2000, scoped, tag = 'output window, operand 0, single buffered']
    %6 = vsyncpa [#allocation3], 0
    %7 = vsyncpa [#allocation4], 0
    // Predicated region
    $region2: #{tpu_custom_call.1} parent=1 // pred_check
      _
    $region3: #{tpu_custom_call.1} parent=1 // pred_check_branch
      %9 = sbr.rel (0) target = $region5
    $region4: #{tpu_custom_call.1} parent=1 // pred_region
      %11 = vsyncadd [#allocation3], 0
      %s12 = sshll.u32 %s0, 4
      %s13 = int_to_ptr.hbm [resolvable:$true] %s12
      %s14 = sshll.u32 [#allocation2], 4
      %s15 = int_to_ptr.vmem [resolvable:$true] %s14
      %20 = dma.hbm_to_vmem [thread:$0]  %s13, 256, %s15, [#allocation3], 128, 128, 8
    $region5: #{tpu_custom_call.1} parent=1 // pred_fallthru
      _
    // Predicated region
    $region6: #{tpu_custom_call.1} parent=1 // pred_check
      _
    $region7: #{tpu_custom_call.1} parent=1 // pred_check_branch
      %22 = sbr.rel (0) target = $region9
    $region8: #{tpu_custom_call.1} parent=1 // pred_region
      %24 = dma.done [#allocation3], 256
    $region9: #{tpu_custom_call.1} parent=1 // pred_fallthru
      _
    %v25 = vlaneseq
    %v26 = vand.u32 %v25, 127
    %v27 = vld [vmem:[#allocation2] sm:$0xff]
    %v28 = vld [vmem:[#allocation2 + $0x8] sm:$0xff]
    %v29 = vmax.f32 %v27, 0.0
    %v30 = vmax.f32 %v28, 0.0
    %vm31 = vcmask 261120
    %v32 = vsel %vm31, %v29, -inf
    %33 = vmax.xlane.f32.xlu0 %v32
    %v34 = vpop.xlane.xlu0 %33
    %v35 = vsel %vm31, %v30, -inf
    %36 = vmax.xlane.f32.xlu0 %v35
    %v37 = vpop.xlane.xlu0 %36
    %vm38 = vcmp.eq.f32.partialorder %v29, %v34
    %vm39 = vcmp.eq.f32.partialorder %v30, %v37
    %v40 = vsel %vm38, %v26, 32
    %v41 = vsel %vm39, %v26, 32
    %v42 = vsel %vm31, %v40, 2147483647
    %v43 = vand.u32 %v42, 65535
    %v44 = vshra.s32 %v42, 16
    %v45 = vcvt.s32.f32 %v43
    %v46 = vcvt.s32.f32 %v44
    %47 = vmin.xlane.f32.xlu0 %v46
    %v48 = vpop.xlane.xlu0 %47
    %vm49 = vcmp.eq.f32.partialorder %v46, %v48
    %v50 = vsel %vm49, %v45, inf
    %51 = vmin.xlane.f32.xlu0 %v50
    %v52 = vpop.xlane.xlu0 %51
    %v53 = vcvt.f32.s32 %v52
    %v54 = vcvt.f32.s32 %v48
    %v55 = vshll.u32 %v54, 16
    %v56 = vadd.s32 %v55, %v53
    %v57 = vsel %vm31, %v41, 2147483647
    %v58 = vand.u32 %v57, 65535
    %v59 = vshra.s32 %v57, 16
    %v60 = vcvt.s32.f32 %v58
    %v61 = vcvt.s32.f32 %v59
    %62 = vmin.xlane.f32.xlu0 %v61
    %v63 = vpop.xlane.xlu0 %62
    %vm64 = vcmp.eq.f32.partialorder %v61, %v63
    %v65 = vsel %vm64, %v60, inf
    %66 = vmin.xlane.f32.xlu0 %v65
    %v67 = vpop.xlane.xlu0 %66
    %v68 = vcvt.f32.s32 %v67
    %v69 = vcvt.f32.s32 %v63
    %v70 = vshll.u32 %v69, 16
    %v71 = vadd.s32 %v70, %v68
    %vm72 = vcmp.eq.s32.totalorder %v26, %v56
    %vm73 = vcmp.eq.s32.totalorder %v26, %v71
    %v74 = vsel %vm72, -inf, %v29
    %v75 = vsel %vm73, -inf, %v30
    %v76 = vsel %vm31, %v74, -inf
    %77 = vmax.xlane.f32.xlu0 %v76
    %v78 = vpop.xlane.xlu0 %77
    %v79 = vsel %vm31, %v75, -inf
    %80 = vmax.xlane.f32.xlu0 %v79
    %v81 = vpop.xlane.xlu0 %80
    %vm82 = vcmp.eq.f32.partialorder %v74, %v78
    %vm83 = vcmp.eq.f32.partialorder %v75, %v81
    %v84 = vsel %vm82, %v26, 32
    %v85 = vsel %vm83, %v26, 32
    %v86 = vsel %vm31, %v84, 2147483647
    %v87 = vand.u32 %v86, 65535
    %v88 = vshra.s32 %v86, 16
    %v89 = vcvt.s32.f32 %v87
    %v90 = vcvt.s32.f32 %v88
    %91 = vmin.xlane.f32.xlu0 %v90
    %v92 = vpop.xlane.xlu0 %91
    %vm93 = vcmp.eq.f32.partialorder %v90, %v92
    %v94 = vsel %vm93, %v89, inf
    %95 = vmin.xlane.f32.xlu0 %v94
    %v96 = vpop.xlane.xlu0 %95
    %v97 = vcvt.f32.s32 %v96
    %v98 = vcvt.f32.s32 %v92
    %v99 = vshll.u32 %v98, 16
    %v100 = vadd.s32 %v99, %v97
    %v101 = vsel %vm31, %v85, 2147483647
    %v102 = vand.u32 %v101, 65535
    %v103 = vshra.s32 %v101, 16
    %v104 = vcvt.s32.f32 %v102
    %v105 = vcvt.s32.f32 %v103
    %106 = vmin.xlane.f32.xlu0 %v105
    %v107 = vpop.xlane.xlu0 %106
    %vm108 = vcmp.eq.f32.partialorder %v105, %v107
    %v109 = vsel %vm108, %v104, inf
    %110 = vmin.xlane.f32.xlu0 %v109
    %v111 = vpop.xlane.xlu0 %110
    %v112 = vcvt.f32.s32 %v111
    %v113 = vcvt.f32.s32 %v107
    %v114 = vshll.u32 %v113, 16
    %v115 = vadd.s32 %v114, %v112
    %vm116 = vcmp.eq.s32.totalorder %v26, %v100
    %vm117 = vcmp.eq.s32.totalorder %v26, %v115
    %v118 = vsel %vm116, -inf, %v74
    %v119 = vsel %vm117, -inf, %v75
    %v120 = vsel %vm31, %v118, -inf
    %121 = vmax.xlane.f32.xlu0 %v120
    %v122 = vpop.xlane.xlu0 %121
    %v123 = vsel %vm31, %v119, -inf
    %124 = vmax.xlane.f32.xlu0 %v123
    %v125 = vpop.xlane.xlu0 %124
    %vm126 = vcmp.eq.f32.partialorder %v118, %v122
    %vm127 = vcmp.eq.f32.partialorder %v119, %v125
    %v128 = vsel %vm126, %v26, 32
    %v129 = vsel %vm127, %v26, 32
    %v130 = vsel %vm31, %v128, 2147483647
    %v131 = vand.u32 %v130, 65535
    %v132 = vshra.s32 %v130, 16
    %v133 = vcvt.s32.f32 %v131
    %v134 = vcvt.s32.f32 %v132
    %135 = vmin.xlane.f32.xlu0 %v134
    %v136 = vpop.xlane.xlu0 %135
    %vm137 = vcmp.eq.f32.partialorder %v134, %v136
    %v138 = vsel %vm137, %v133, inf
    %139 = vmin.xlane.f32.xlu0 %v138
    %v140 = vpop.xlane.xlu0 %139
    %v141 = vcvt.f32.s32 %v140
    %v142 = vcvt.f32.s32 %v136
    %v143 = vshll.u32 %v142, 16
    %v144 = vadd.s32 %v143, %v141
    %v145 = vsel %vm31, %v129, 2147483647
    %v146 = vand.u32 %v145, 65535
    %v147 = vshra.s32 %v145, 16
    %v148 = vcvt.s32.f32 %v146
    %v149 = vcvt.s32.f32 %v147
    %150 = vmin.xlane.f32.xlu0 %v149
    %v151 = vpop.xlane.xlu0 %150
    %vm152 = vcmp.eq.f32.partialorder %v149, %v151
    %v153 = vsel %vm152, %v148, inf
    %154 = vmin.xlane.f32.xlu0 %v153
    %v155 = vpop.xlane.xlu0 %154
    %v156 = vcvt.f32.s32 %v155
    %v157 = vcvt.f32.s32 %v151
    %v158 = vshll.u32 %v157, 16
    %v159 = vadd.s32 %v158, %v156
    %vm160 = vcmp.eq.s32.totalorder %v26, %v144
    %vm161 = vcmp.eq.s32.totalorder %v26, %v159
    %v162 = vsel %vm160, -inf, %v118
    %v163 = vsel %vm161, -inf, %v119
    %v164 = vsel %vm31, %v162, -inf
    %165 = vmax.xlane.f32.xlu0 %v164
    %v166 = vpop.xlane.xlu0 %165
    %v167 = vsel %vm31, %v163, -inf
    %168 = vmax.xlane.f32.xlu0 %v167
    %v169 = vpop.xlane.xlu0 %168
    %vm170 = vcmp.eq.f32.partialorder %v162, %v166
    %vm171 = vcmp.eq.f32.partialorder %v163, %v169
    %v172 = vsel %vm170, %v26, 32
    %v173 = vsel %vm171, %v26, 32
    %v174 = vsel %vm31, %v172, 2147483647
    %v175 = vand.u32 %v174, 65535
    %v176 = vshra.s32 %v174, 16
    %v177 = vcvt.s32.f32 %v175
    %v178 = vcvt.s32.f32 %v176
    %179 = vmin.xlane.f32.xlu0 %v178
    %v180 = vpop.xlane.xlu0 %179
    %vm181 = vcmp.eq.f32.partialorder %v178, %v180
    %v182 = vsel %vm181, %v177, inf
    %183 = vmin.xlane.f32.xlu0 %v182
    %v184 = vpop.xlane.xlu0 %183
    %v185 = vcvt.f32.s32 %v184
    %v186 = vcvt.f32.s32 %v180
    %v187 = vshll.u32 %v186, 16
    %v188 = vadd.s32 %v187, %v185
    %v189 = vsel %vm31, %v173, 2147483647
    %v190 = vand.u32 %v189, 65535
    %v191 = vshra.s32 %v189, 16
    %v192 = vcvt.s32.f32 %v190
    %v193 = vcvt.s32.f32 %v191
    %194 = vmin.xlane.f32.xlu0 %v193
    %v195 = vpop.xlane.xlu0 %194
    %vm196 = vcmp.eq.f32.partialorder %v193, %v195
    %v197 = vsel %vm196, %v192, inf
    %198 = vmin.xlane.f32.xlu0 %v197
    %v199 = vpop.xlane.xlu0 %198
    %v200 = vcvt.f32.s32 %v199
    %v201 = vcvt.f32.s32 %v195
    %v202 = vshll.u32 %v201, 16
    %v203 = vadd.s32 %v202, %v200
    %vm204 = vcmp.eq.s32.totalorder %v26, %v188
    %vm205 = vcmp.eq.s32.totalorder %v26, %v203
    %v206 = vsel %vm204, -inf, %v162
    %v207 = vsel %vm205, -inf, %v163
    %vm208 = vcmp.lt.f32.partialorder %v206, 0.0
    %vm209 = vcmp.lt.f32.partialorder %v207, 0.0
    %v210 = vsel %vm208, %v29, 0.0
    %v211 = vsel %vm209, %v30, 0.0
    %212 = vst.msk [vmem:[#allocation5] sm:$0xff] %vm31, %v210
    %213 = vst.msk [vmem:[#allocation5 + $0x8] sm:$0xff] %vm31, %v211
    // Predicated region
    $region10: #{tpu_custom_call.1} parent=1 // pred_check
      _
    $region11: #{tpu_custom_call.1} parent=1 // pred_check_branch
      %215 = sbr.rel (0) target = $region13
    $region12: #{tpu_custom_call.1} parent=1 // pred_region
      %217 = vsyncadd [#allocation4], 0
      %s218 = sshll.u32 [#allocation5], 4
      %s219 = int_to_ptr.vmem [resolvable:$true] %s218
      %s220 = sshll.u32 %s1, 4
      %s221 = int_to_ptr.hbm [resolvable:$true] %s220
      %226 = dma.vmem_to_hbm [thread:$0]  %s219, 256, %s221, [#allocation4], 128, 128, 8
    $region13: #{tpu_custom_call.1} parent=1 // pred_fallthru
      _
    // Predicated region
    $region14: #{tpu_custom_call.1} parent=1 // pred_check
      _
    $region15: #{tpu_custom_call.1} parent=1 // pred_check_branch
      %228 = sbr.rel (0) target = $region17
    $region16: #{tpu_custom_call.1} parent=1 // pred_region
      %230 = dma.done [#allocation4], 256
    $region17: #{tpu_custom_call.1} parent=1 // pred_fallthru
      _
    %231 = vsyncpa [#allocation3], 1
    %232 = vsyncpa [#allocation4], 1

</llo_original>
